<compile_context>
chip_gen: v7x
topology: tpu7x:2x2x1
jax: 0.10.0
libtpu: 0.0.40
codegen_flags: <defaults>
</compile_context>

<pallas_src>
from collections import defaultdict

import jax
import jax.numpy as jnp
import numpy as np
from jax.experimental import pallas as pl
from jax.experimental.pallas import tpu as pltpu

_LANE = 128
_SUBLANE = 8


def _round_up(x, m):
    return (x + m - 1) // m * m


def _fused_multitask_kernel(h_ref, w_ref, mask_ref, bias_ref, fold_ref, o_ref):
    """One batch tile: fused all-tasks matmul + masked column fold.

    h_ref    : (Bt, H)        compute dtype (bf16/f32), hidden states
    w_ref    : (H, N_pad)     compute dtype, all task weights side by side
    mask_ref : (Bt, N_pad)    f32, 1.0 where the column belongs to the row's task
    bias_ref : (1, N_pad)     f32, per-task biases laid out like W_all columns
    fold_ref : (N_pad, O_pad) f32 0/1, folds column t*O+o -> output column o
    o_ref    : (Bt, O_pad)    f32, lane-dense output slab
    """
    # (Bt, H) x (H, N_pad) -> (Bt, N_pad): one MXU matmul over ALL tasks.
    y = jnp.dot(h_ref[...], w_ref[...], preferred_element_type=jnp.float32)
    # Add every task's bias, then keep only this row's task columns.
    y = (y + bias_ref[...]) * mask_ref[...]
    # Exact 0/1 fold: (Bt, N_pad) x (N_pad, O_pad) -> lane-dense output tile.
    o_ref[...] = jnp.dot(y, fold_ref[...],
                         preferred_element_type=jnp.float32).astype(o_ref.dtype)


def multi_maintask_forward(h_root, task_ids, W, Bias, *,
                           compute_dtype=jnp.bfloat16, block_b=256):
    """h_root: [B,H]; task_ids: [B] int; W: [T,O,H]; Bias: [T,1,O] -> [B,O] f32."""
    B, H = h_root.shape
    T, O, _ = W.shape
    n = T * O
    n_pad = _round_up(n, _LANE)
    o_pad = _round_up(O, _LANE)

    # All task weights as one lane-dense RHS: W_all[:, t*O + o] = W[t, o, :]
    # (i.e. column block t is W[t].T).  Paid once at trace time.
    w_all = jnp.transpose(W, (2, 0, 1)).reshape(H, n)
    w_all = jnp.pad(w_all, ((0, 0), (0, n_pad - n))).astype(compute_dtype)

    # Per-task biases laid out to match W_all's columns.
    bias_flat = jnp.pad(Bias.reshape(n).astype(jnp.float32),
                        (0, n_pad - n)).reshape(1, n_pad)

    # Exact 0/1 fold matrix: column t*O + o contributes to output column o.
    cols = np.arange(n_pad)
    fold_np = np.zeros((n_pad, o_pad), dtype=np.float32)
    fold_np[cols[:n], cols[:n] % O] = 1.0
    fold = jnp.asarray(fold_np)

    # Batch tiling: tile is a multiple of 8; pad the batch to whole tiles
    # (padded rows get task id -1 -> all-zero mask -> zero output rows).
    b_tile = min(_round_up(B, _SUBLANE), _round_up(block_b, _SUBLANE))
    b_pad = _round_up(B, b_tile)
    h_p = jnp.pad(h_root, ((0, b_pad - B), (0, 0))).astype(compute_dtype)
    tid = jnp.pad(task_ids.astype(jnp.int32), (0, b_pad - B),
                  constant_values=-1)

    # Lane-dense per-row column mask (built host/XLA side, fused & cheap).
    col_task = jnp.asarray(np.where(cols < n, cols // max(O, 1), -2),
                           dtype=jnp.int32)
    mask = (col_task[None, :] == tid[:, None]).astype(jnp.float32)

    grid = (b_pad // b_tile,)
    grid_spec = pltpu.PrefetchScalarGridSpec(
        num_scalar_prefetch=0,
        grid=grid,
        in_specs=[
            pl.BlockSpec((b_tile, H), lambda i: (i, 0)),       # hidden tile
            pl.BlockSpec((H, n_pad), lambda i: (0, 0)),        # all task weights
            pl.BlockSpec((b_tile, n_pad), lambda i: (i, 0)),   # column mask
            pl.BlockSpec((1, n_pad), lambda i: (0, 0)),        # biases
            pl.BlockSpec((n_pad, o_pad), lambda i: (0, 0)),    # fold matrix
        ],
        out_specs=pl.BlockSpec((b_tile, o_pad), lambda i: (i, 0)),
    )
    out = pl.pallas_call(
        _fused_multitask_kernel,
        out_shape=jax.ShapeDtypeStruct((b_pad, o_pad), jnp.float32),
        grid_spec=grid_spec,
        compiler_params=pltpu.CompilerParams(
            dimension_semantics=("parallel",)),
    )(h_p, w_all, mask, bias_flat, fold)
    return out[:B, :O]


def reference_forward(h_root, tasks, task_name_to_id, W, Bias):
    """Pure-numpy mirror of MultiMainTaskConnector.multi_tasking."""
    h_root = np.asarray(h_root)
    W = np.asarray(W)
    Bias = np.asarray(Bias)
    batch_hidden_dict = defaultdict(list)
    batch_indices_to_task_indices = {}
    for i, task_name in enumerate(tasks):
        batch_indices_to_task_indices[i] = (task_name,
                                            len(batch_hidden_dict[task_name]))
        batch_hidden_dict[task_name].append(h_root[i])
    batch_output_dict = {}
    for task_name, hid_list in batch_hidden_dict.items():
        t = task_name_to_id[task_name]
        hb = np.stack(hid_list, axis=0)                 # (n_t, H)
        batch_output_dict[task_name] = hb @ W[t].T + Bias[t, 0]
    outputs = [batch_output_dict[tn][ti]
               for _, (tn, ti) in batch_indices_to_task_indices.items()]
    return np.stack(outputs, axis=0)


if __name__ == "__main__":
    B, H, O, T = 8, 32, 16, 3
    task_names = ["taskA", "taskB", "taskC"]
    task_name_to_id = {n: i for i, n in enumerate(task_names)}

    key = jax.random.PRNGKey(0)
    k_h, k_w, k_b, k_t = jax.random.split(key, 4)

    h_root = jax.random.normal(k_h, (B, H), dtype=jnp.float32)

    # Xavier-uniform init for each task's Linear weight (out=O, in=H).
    bound_w = float(np.sqrt(6.0 / (H + O)))
    W = jax.random.uniform(k_w, (T, O, H), dtype=jnp.float32,
                           minval=-bound_w, maxval=bound_w)
    # nn.Linear default bias init: U(-1/sqrt(fan_in), 1/sqrt(fan_in)).
    bound_b = float(1.0 / np.sqrt(H))
    Bias = jax.random.uniform(k_b, (T, 1, O), dtype=jnp.float32,
                              minval=-bound_b, maxval=bound_b)

    # Deterministic per-sample task assignment.
    task_ids = jax.random.randint(k_t, (B,), 0, T, dtype=jnp.int32)
    tasks = [task_names[int(t)] for t in np.asarray(task_ids)]

    ref = reference_forward(h_root, tasks, task_name_to_id, W, Bias)

    # f32 compute path: tight tolerance against the numpy group->linear->scatter.
    out_f32 = jax.block_until_ready(
        multi_maintask_forward(h_root, task_ids, W, Bias,
                               compute_dtype=jnp.float32))
    np.testing.assert_allclose(np.asarray(out_f32), ref, rtol=1e-5, atol=1e-5)

    # Default bf16 MXU path (f32 accumulation): looser tolerance.
    out_bf16 = jax.block_until_ready(
        multi_maintask_forward(h_root, task_ids, W, Bias))
    np.testing.assert_allclose(np.asarray(out_bf16), ref, rtol=5e-2, atol=5e-2)

    # Multi-tile grid + batch-padding path (B not a multiple of the tile).
    B2 = 40
    k_h2, k_t2 = jax.random.split(jax.random.PRNGKey(1), 2)
    h2 = jax.random.normal(k_h2, (B2, H), dtype=jnp.float32)
    tid2 = jax.random.randint(k_t2, (B2,), 0, T, dtype=jnp.int32)
    tasks2 = [task_names[int(t)] for t in np.asarray(tid2)]
    ref2 = reference_forward(h2, tasks2, task_name_to_id, W, Bias)
    out2 = jax.block_until_ready(
        multi_maintask_forward(h2, tid2, W, Bias,
                               compute_dtype=jnp.float32, block_b=16))
    np.testing.assert_allclose(np.asarray(out2), ref2, rtol=1e-5, atol=1e-5)

    print("KERNEL_OK")
</pallas_src>

<mosaic_0001>
module attributes {stable_mosaic.version = 11 : i64} {
  func.func @_fused_multitask_kernel(%arg0: i32, %arg1: memref<8x32xf32, #tpu.memory_space<vmem>>, %arg2: memref<32x128xf32, #tpu.memory_space<vmem>>, %arg3: memref<8x128xf32, #tpu.memory_space<vmem>>, %arg4: memref<1x128xf32, #tpu.memory_space<vmem>>, %arg5: memref<128x128xf32, #tpu.memory_space<vmem>>, %arg6: memref<8x128xf32, #tpu.memory_space<vmem>>) attributes {dimension_semantics = [#tpu.dimension_semantics<parallel>], iteration_bounds = array<i64: 1>, scalar_prefetch = 0 : i64, scratch_operands = 0 : i64, tpu.core_type = #tpu.core_type<tc>, window_params = [{transform_indices = @transform_0, window_bounds = array<i64: 8, 32>}, {pipeline_mode = #tpu.pipeline_mode<synchronous>, transform_indices = @transform_1, window_bounds = array<i64: 32, 128>}, {transform_indices = @transform_2, window_bounds = array<i64: 8, 128>}, {pipeline_mode = #tpu.pipeline_mode<synchronous>, transform_indices = @transform_3, window_bounds = array<i64: 1, 128>}, {pipeline_mode = #tpu.pipeline_mode<synchronous>, transform_indices = @transform_4, window_bounds = array<i64: 128, 128>}, {transform_indices = @transform_5, window_bounds = array<i64: 8, 128>}]} {
    %c0 = arith.constant 0 : index
    %c0_0 = arith.constant 0 : index
    %0 = vector.load %arg1[%c0, %c0_0] : memref<8x32xf32, #tpu.memory_space<vmem>>, vector<8x32xf32>
    %c0_1 = arith.constant 0 : index
    %c0_2 = arith.constant 0 : index
    %1 = vector.load %arg2[%c0_1, %c0_2] : memref<32x128xf32, #tpu.memory_space<vmem>>, vector<32x128xf32>
    %cst = arith.constant dense<0.000000e+00> : vector<8x128xf32>
    %2 = tpu.matmul %0, %1, %cst {dimension_numbers = #tpu.dot_dimension_numbers<[1], [0], [0], [1], [0, 0, 1, 1], [], []>} : vector<8x32xf32>, vector<32x128xf32>, vector<8x128xf32> -> vector<8x128xf32>
    %c0_3 = arith.constant 0 : index
    %c0_4 = arith.constant 0 : index
    %3 = vector.load %arg4[%c0_3, %c0_4] : memref<1x128xf32, #tpu.memory_space<vmem>>, vector<1x128xf32>
    %4 = vector.broadcast %3 : vector<1x128xf32> to vector<8x128xf32>
    %5 = arith.addf %2, %4 : vector<8x128xf32>
    %c0_5 = arith.constant 0 : index
    %c0_6 = arith.constant 0 : index
    %6 = vector.load %arg3[%c0_5, %c0_6] : memref<8x128xf32, #tpu.memory_space<vmem>>, vector<8x128xf32>
    %7 = arith.mulf %5, %6 : vector<8x128xf32>
    %c0_7 = arith.constant 0 : index
    %c0_8 = arith.constant 0 : index
    %8 = vector.load %arg5[%c0_7, %c0_8] : memref<128x128xf32, #tpu.memory_space<vmem>>, vector<128x128xf32>
    %cst_9 = arith.constant dense<0.000000e+00> : vector<8x128xf32>
    %9 = tpu.matmul %7, %8, %cst_9 {dimension_numbers = #tpu.dot_dimension_numbers<[1], [0], [0], [1], [0, 0, 1, 1], [], []>} : vector<8x128xf32>, vector<128x128xf32>, vector<8x128xf32> -> vector<8x128xf32>
    %c0_10 = arith.constant 0 : index
    %c0_11 = arith.constant 0 : index
    %10 = vector.load %arg6[%c0_10, %c0_11] : memref<8x128xf32, #tpu.memory_space<vmem>>, vector<8x128xf32>
    tpu.vector_store %arg6[%c0_10, %c0_11], %9 {strides = array<i32>} : memref<8x128xf32, #tpu.memory_space<vmem>>, vector<8x128xf32>,
    return
  }
  func.func @transform_0(%arg0: i32) -> (i32, i32) {
    %c0_i32 = arith.constant 0 : i32
    %c0_i32_0 = arith.constant 0 : i32
    return %arg0, %c0_i32 : i32, i32
  }
  func.func @transform_1(%arg0: i32) -> (i32, i32) {
    %c0_i32 = arith.constant 0 : i32
    %c0_i32_0 = arith.constant 0 : i32
    %c0_i32_1 = arith.constant 0 : i32
    return %c0_i32, %c0_i32_0 : i32, i32
  }
  func.func @transform_2(%arg0: i32) -> (i32, i32) {
    %c0_i32 = arith.constant 0 : i32
    %c0_i32_0 = arith.constant 0 : i32
    return %arg0, %c0_i32 : i32, i32
  }
  func.func @transform_3(%arg0: i32) -> (i32, i32) {
    %c0_i32 = arith.constant 0 : i32
    %c0_i32_0 = arith.constant 0 : i32
    %c0_i32_1 = arith.constant 0 : i32
    return %c0_i32, %c0_i32_0 : i32, i32
  }
  func.func @transform_4(%arg0: i32) -> (i32, i32) {
    %c0_i32 = arith.constant 0 : i32
    %c0_i32_0 = arith.constant 0 : i32
    %c0_i32_1 = arith.constant 0 : i32
    return %c0_i32, %c0_i32_0 : i32, i32
  }
  func.func @transform_5(%arg0: i32) -> (i32, i32) {
    %c0_i32 = arith.constant 0 : i32
    %c0_i32_0 = arith.constant 0 : i32
    return %arg0, %c0_i32 : i32, i32
  }
}

</mosaic_0001>

<llo_original>
// kernel: tpu_custom_call.1
$region0: #{tpu_custom_call.1}
  #allocation0 [shape = 'u32[]', space=smem, size = 0x4, offset = 0x4, fixed_abs, tag = 'smem constant byte address 0x4 - core index']
  #allocation1 [shape = 'u32[144,128]{1,0:T(1,128)}', space=vmem, size = 0x12000, scoped, tag = 'internal scratch']
  %s0 = inlined_call_operand.hbm [shape: f32[8,32], index: 0, kind: input, shape index: {}]
  %s1 = inlined_call_operand.hbm [shape: f32[32,128], index: 1, kind: input, shape index: {}]
  %s2 = inlined_call_operand.hbm [shape: f32[8,128], index: 2, kind: input, shape index: {}]
  %s3 = inlined_call_operand.vmem [shape: f32[1,128], index: 3, kind: input, shape index: {}]
  %s4 = inlined_call_operand.hbm [shape: f32[128,128], index: 4, kind: input, shape index: {}]
  %s5 = inlined_call_operand.hbm [shape: f32[8,128], index: 5, kind: output, shape index: {}]
  %s6 = sld [smem:[#allocation0]]
  $region46: #{tpu_custom_call.1} parent=0
    _
  %s8 = ssub.s32 1, %s6
  %s9 = scalar_select 0, %s8, %s6
  $region1: #{tpu_custom_call.1} parent=0
    #allocation2 [shape = 'u8[4096]{0}', space=vmem, size = 0x1000, scoped, tag = 'input window, operand 0, single buffered']
    #allocation3 [shape = 's32[1]{0}', space=sflag, size = 0x4, scoped, tag = 'scoped memory for tpu_custom_call.1']
    #allocation4 [shape = 's32[1]{0}', space=sflag, size = 0x4, scoped, tag = 'scoped memory for tpu_custom_call.1']
    #allocation5 [shape = 'u8[16384]{0}', space=vmem, size = 0x4000, scoped, tag = 'input window, operand 1, single buffered']
    #allocation6 [shape = 's32[1]{0}', space=sflag, size = 0x4, scoped, tag = 'scoped memory for tpu_custom_call.1']
    #allocation7 [shape = 'u8[4096]{0}', space=vmem, size = 0x1000, scoped, tag = 'input window, operand 2, single buffered']
    #allocation8 [shape = 'u8[65536]{0}', space=vmem, size = 0x10000, scoped, tag = 'input window, operand 4, single buffered']
    #allocation9 [shape = 's32[1]{0}', space=sflag, size = 0x4, scoped, tag = 'scoped memory for tpu_custom_call.1']
    #allocation10 [shape = 'u8[4096]{0}', space=vmem, size = 0x1000, scoped, tag = 'output window, operand 0, single buffered']
    %10 = vsyncpa [#allocation3], 0
    %11 = vsyncpa [#allocation6], 0
    %12 = vsyncpa [#allocation9], 0
    %13 = vsyncpa [#allocation4], 0
    // Predicated region
    $region2: #{tpu_custom_call.1} parent=1 // pred_check
      _
    $region3: #{tpu_custom_call.1} parent=1 // pred_check_branch
      %15 = sbr.rel (0) target = $region5
    $region4: #{tpu_custom_call.1} parent=1 // pred_region
      %s17 = ssub.s32 128, 128
      %18 = vsyncadd [#allocation3], %s17
      %s20 = sshll.u32 [#allocation2], 4
      %s21 = int_to_ptr.vmem [resolvable:$true] %s20
      %23 = dma.hbm_to_vmem [thread:$0]  %s0, 128, %s21, [#allocation3]
    $region5: #{tpu_custom_call.1} parent=1 // pred_fallthru
      _
    // Predicated region
    $region6: #{tpu_custom_call.1} parent=1 // pred_check
      _
    $region7: #{tpu_custom_call.1} parent=1 // pred_check_branch
      %25 = sbr.rel (0) target = $region9
    $region8: #{tpu_custom_call.1} parent=1 // pred_region
      %s27 = ssub.s32 512, 512
      %28 = vsyncadd [#allocation6], %s27
      %s29 = sshll.u32 [#allocation5], 4
      %s30 = int_to_ptr.vmem [resolvable:$true] %s29
      %35 = dma.hbm_to_vmem [thread:$0]  %s1, 512, %s30, [#allocation6], 128, 128, 8
    $region9: #{tpu_custom_call.1} parent=1 // pred_fallthru
      _
    // Predicated region
    $region10: #{tpu_custom_call.1} parent=1 // pred_check
      _
    $region11: #{tpu_custom_call.1} parent=1 // pred_check_branch
      %37 = sbr.rel (0) target = $region13
    $region12: #{tpu_custom_call.1} parent=1 // pred_region
      %s39 = ssub.s32 128, 128
      %40 = vsyncadd [#allocation6], %s39
      %s42 = sshll.u32 [#allocation7], 4
      %s43 = int_to_ptr.vmem [resolvable:$true] %s42
      %45 = dma.hbm_to_vmem [thread:$0]  %s2, 128, %s43, [#allocation6]
    $region13: #{tpu_custom_call.1} parent=1 // pred_fallthru
      _
    // Predicated region
    $region14: #{tpu_custom_call.1} parent=1 // pred_check
      _
    $region15: #{tpu_custom_call.1} parent=1 // pred_check_branch
      %47 = sbr.rel (0) target = $region17
    $region16: #{tpu_custom_call.1} parent=1 // pred_region
      _
    $region17: #{tpu_custom_call.1} parent=1 // pred_fallthru
      _
    // Predicated region
    $region18: #{tpu_custom_call.1} parent=1 // pred_check
      _
    $region19: #{tpu_custom_call.1} parent=1 // pred_check_branch
      %49 = sbr.rel (0) target = $region21
    $region20: #{tpu_custom_call.1} parent=1 // pred_region
      %s51 = ssub.s32 2048, 2048
      %52 = vsyncadd [#allocation9], %s51
      %s53 = sshll.u32 [#allocation8], 4
      %s54 = int_to_ptr.vmem [resolvable:$true] %s53
      %59 = dma.hbm_to_vmem [thread:$0]  %s4, 2048, %s54, [#allocation9], 128, 128, 8
    $region21: #{tpu_custom_call.1} parent=1 // pred_fallthru
      _
    // Predicated region
    $region22: #{tpu_custom_call.1} parent=1 // pred_check
      _
    $region23: #{tpu_custom_call.1} parent=1 // pred_check_branch
      %61 = sbr.rel (0) target = $region25
    $region24: #{tpu_custom_call.1} parent=1 // pred_region
      %62 = dma.done [#allocation3], 128
    $region25: #{tpu_custom_call.1} parent=1 // pred_fallthru
      _
    // Predicated region
    $region26: #{tpu_custom_call.1} parent=1 // pred_check
      _
    $region27: #{tpu_custom_call.1} parent=1 // pred_check_branch
      %64 = sbr.rel (0) target = $region29
    $region28: #{tpu_custom_call.1} parent=1 // pred_region
      %65 = dma.done [#allocation6], 512
    $region29: #{tpu_custom_call.1} parent=1 // pred_fallthru
      _
    // Predicated region
    $region30: #{tpu_custom_call.1} parent=1 // pred_check
      _
    $region31: #{tpu_custom_call.1} parent=1 // pred_check_branch
      %67 = sbr.rel (0) target = $region33
    $region32: #{tpu_custom_call.1} parent=1 // pred_region
      %68 = dma.done [#allocation6], 128
    $region33: #{tpu_custom_call.1} parent=1 // pred_fallthru
      _
    // Predicated region
    $region34: #{tpu_custom_call.1} parent=1 // pred_check
      _
    $region35: #{tpu_custom_call.1} parent=1 // pred_check_branch
      %70 = sbr.rel (0) target = $region37
    $region36: #{tpu_custom_call.1} parent=1 // pred_region
      %71 = dma.done [#allocation9], 2048
    $region37: #{tpu_custom_call.1} parent=1 // pred_fallthru
      _
    %v72 = vld [vmem:[#allocation2] sm:$0xff]
    %v73 = vld [vmem:[#allocation5] sm:$0xff]
    %v74 = vld [vmem:[#allocation5 + $0x8] sm:$0xff]
    %v75 = vld [vmem:[#allocation5 + $0x10] sm:$0xff]
    %v76 = vld [vmem:[#allocation5 + $0x18] sm:$0xff]
    %v77 = vld [vmem:[%s3] sm:$0x1]
    %v79 = vlaneseq
    %v80 = vshrl.u32 %v79, 7
    %v81 = vsub.s32 0, %v80
    %v82 = vrot.slane %v77, %v81
    %vm84 = vcmask 261120
    %v86 = vsel %vm84, %v72, 0
    %88 = vmatprep.subr.mxu0 0.0
    %89 = vmatpush1.msra.mxu0 %v73
    %90 = vmatprep.subr.mxu0 0.0
    %91 = vmatpush1.msra.mxu0 %v74
    %92 = vmatprep.subr.mxu0 0.0
    %93 = vmatpush1.msra.mxu0 %v75
    %94 = vmatprep.subr.mxu0 0.0
    %95 = vmatpush1.msra.mxu0 %v76
    %96 = vmatprep.subr.mxu0 0.0
    %97 = vmatpush1.msra.mxu0 0.0
    %98 = vmatprep.subr.mxu0 0.0
    %99 = vmatpush1.msra.mxu0 0.0
    %100 = vmatprep.subr.mxu0 0.0
    %101 = vmatpush1.msra.mxu0 0.0
    %102 = vmatprep.subr.mxu0 0.0
    %103 = vmatpush1.msra.mxu0 0.0
    %104 = vmatprep.subr.mxu0 0.0
    %105 = vmatpush1.msra.mxu0 0.0
    %106 = vmatprep.subr.mxu0 0.0
    %107 = vmatpush1.msra.mxu0 0.0
    %108 = vmatprep.subr.mxu0 0.0
    %109 = vmatpush1.msra.mxu0 0.0
    %110 = vmatprep.subr.mxu0 0.0
    %111 = vmatpush1.msra.mxu0 0.0
    %112 = vmatprep.subr.mxu0 0.0
    %113 = vmatpush1.msra.mxu0 0.0
    %114 = vmatprep.subr.mxu0 0.0
    %115 = vmatpush1.msra.mxu0 0.0
    %116 = vmatprep.subr.mxu0 0.0
    %117 = vmatpush1.msra.mxu0 0.0
    %118 = vmatprep.subr.mxu0 0.0
    %119 = vmatpush1.msra.mxu0 0.0
    %120 = vmatprep.subr.mxu0 0.0
    %121 = vmatpush1.msra.mxu0 0.0
    %122 = vmatprep.subr.mxu0 0.0
    %123 = vmatpush1.msra.mxu0 0.0
    %124 = vmatprep.subr.mxu0 0.0
    %125 = vmatpush1.msra.mxu0 0.0
    %126 = vmatprep.subr.mxu0 0.0
    %127 = vmatpush1.msra.mxu0 0.0
    %128 = vmatprep.subr.mxu0 0.0
    %129 = vmatpush1.msra.mxu0 0.0
    %130 = vmatprep.subr.mxu0 0.0
    %131 = vmatpush1.msra.mxu0 0.0
    %132 = vmatprep.subr.mxu0 0.0
    %133 = vmatpush1.msra.mxu0 0.0
    %134 = vmatprep.subr.mxu0 0.0
    %135 = vmatpush1.msra.mxu0 0.0
    %136 = vmatprep.subr.mxu0 0.0
    %137 = vmatpush1.msra.mxu0 0.0
    %138 = vmatprep.subr.mxu0 0.0
    %139 = vmatpush1.msra.mxu0 0.0
    %140 = vmatprep.subr.mxu0 0.0
    %141 = vmatpush1.msra.mxu0 0.0
    %142 = vmatprep.subr.mxu0 0.0
    %143 = vmatpush1.msra.mxu0 0.0
    %144 = vmatprep.subr.mxu0 0.0
    %145 = vmatpush1.msra.mxu0 0.0
    %146 = vmatprep.subr.mxu0 0.0
    %147 = vmatpush1.msra.mxu0 0.0
    %148 = vmatprep.subr.mxu0 0.0
    %149 = vmatpush1.msra.mxu0 0.0
    %150 = vmatprep.subr.mxu0 0.0
    %151 = vmatpush1.msra.mxu0 0.0
    %152 = vmatprep.mubr.f32.mxu0 0.0
    %153 = vmatmul.mubr.f32.gmra.mrb[0].mxu0 %v86
    %v154 = vpop.f32.mrb[0].mxu0
    %v155 = vadd.f32 %v82, %v154
    %v156 = vpop.f32.mrb[0].mxu0
    %157 = vdwg.mxu0
    %v158 = vld [vmem:[#allocation7] sm:$0xff]
    %v159 = vmul.f32 %v155, %v158
    %v160 = vld [vmem:[#allocation8] sm:$0xff]
    %v161 = vld [vmem:[#allocation8 + $0x8] sm:$0xff]
    %v162 = vld [vmem:[#allocation8 + $0x10] sm:$0xff]
    %v163 = vld [vmem:[#allocation8 + $0x18] sm:$0xff]
    %v164 = vld [vmem:[#allocation8 + $0x20] sm:$0xff]
    %v165 = vld [vmem:[#allocation8 + $0x28] sm:$0xff]
    %v166 = vld [vmem:[#allocation8 + $0x30] sm:$0xff]
    %v167 = vld [vmem:[#allocation8 + $0x38] sm:$0xff]
    %v168 = vld [vmem:[#allocation8 + $0x40] sm:$0xff]
    %v169 = vld [vmem:[#allocation8 + $0x48] sm:$0xff]
    %v170 = vld [vmem:[#allocation8 + $0x50] sm:$0xff]
    %v171 = vld [vmem:[#allocation8 + $0x58] sm:$0xff]
    %v172 = vld [vmem:[#allocation8 + $0x60] sm:$0xff]
    %v173 = vld [vmem:[#allocation8 + $0x68] sm:$0xff]
    %v174 = vld [vmem:[#allocation8 + $0x70] sm:$0xff]
    %v175 = vld [vmem:[#allocation8 + $0x78] sm:$0xff]
    %176 = vmatprep.subr.mxu0 0.0
    %177 = vmatpush1.msra.mxu0 %v160
    %178 = vmatprep.subr.mxu0 0.0
    %179 = vmatpush1.msra.mxu0 %v161
    %180 = vmatprep.subr.mxu0 0.0
    %181 = vmatpush1.msra.mxu0 %v162
    %182 = vmatprep.subr.mxu0 0.0
    %183 = vmatpush1.msra.mxu0 %v163
    %184 = vmatprep.subr.mxu0 0.0
    %185 = vmatpush1.msra.mxu0 %v164
    %186 = vmatprep.subr.mxu0 0.0
    %187 = vmatpush1.msra.mxu0 %v165
    %188 = vmatprep.subr.mxu0 0.0
    %189 = vmatpush1.msra.mxu0 %v166
    %190 = vmatprep.subr.mxu0 0.0
    %191 = vmatpush1.msra.mxu0 %v167
    %192 = vmatprep.subr.mxu0 0.0
    %193 = vmatpush1.msra.mxu0 %v168
    %194 = vmatprep.subr.mxu0 0.0
    %195 = vmatpush1.msra.mxu0 %v169
    %196 = vmatprep.subr.mxu0 0.0
    %197 = vmatpush1.msra.mxu0 %v170
    %198 = vmatprep.subr.mxu0 0.0
    %199 = vmatpush1.msra.mxu0 %v171
    %200 = vmatprep.subr.mxu0 0.0
    %201 = vmatpush1.msra.mxu0 %v172
    %202 = vmatprep.subr.mxu0 0.0
    %203 = vmatpush1.msra.mxu0 %v173
    %204 = vmatprep.subr.mxu0 0.0
    %205 = vmatpush1.msra.mxu0 %v174
    %206 = vmatprep.subr.mxu0 0.0
    %207 = vmatpush1.msra.mxu0 %v175
    %208 = vmatprep.subr.mxu0 0.0
    %209 = vmatpush1.msra.mxu0 0.0
    %210 = vmatprep.subr.mxu0 0.0
    %211 = vmatpush1.msra.mxu0 0.0
    %212 = vmatprep.subr.mxu0 0.0
    %213 = vmatpush1.msra.mxu0 0.0
    %214 = vmatprep.subr.mxu0 0.0
    %215 = vmatpush1.msra.mxu0 0.0
    %216 = vmatprep.subr.mxu0 0.0
    %217 = vmatpush1.msra.mxu0 0.0
    %218 = vmatprep.subr.mxu0 0.0
    %219 = vmatpush1.msra.mxu0 0.0
    %220 = vmatprep.subr.mxu0 0.0
    %221 = vmatpush1.msra.mxu0 0.0
    %222 = vmatprep.subr.mxu0 0.0
    %223 = vmatpush1.msra.mxu0 0.0
    %224 = vmatprep.subr.mxu0 0.0
    %225 = vmatpush1.msra.mxu0 0.0
    %226 = vmatprep.subr.mxu0 0.0
    %227 = vmatpush1.msra.mxu0 0.0
    %228 = vmatprep.subr.mxu0 0.0
    %229 = vmatpush1.msra.mxu0 0.0
    %230 = vmatprep.subr.mxu0 0.0
    %231 = vmatpush1.msra.mxu0 0.0
    %232 = vmatprep.subr.mxu0 0.0
    %233 = vmatpush1.msra.mxu0 0.0
    %234 = vmatprep.subr.mxu0 0.0
    %235 = vmatpush1.msra.mxu0 0.0
    %236 = vmatprep.subr.mxu0 0.0
    %237 = vmatpush1.msra.mxu0 0.0
    %238 = vmatprep.subr.mxu0 0.0
    %239 = vmatpush1.msra.mxu0 0.0
    %240 = vmatprep.mubr.f32.mxu0 0.0
    %241 = vmatmul.mubr.f32.gmra.mrb[0].mxu0 %v159
    %v242 = vpop.f32.mrb[0].mxu0
    %v243 = vadd.f32 0.0, %v242
    %v244 = vpop.f32.mrb[0].mxu0
    %245 = vdwg.mxu0
    %246 = vst [vmem:[#allocation10] sm:$0xff] %v243
    // Predicated region
    $region38: #{tpu_custom_call.1} parent=1 // pred_check
      _
    $region39: #{tpu_custom_call.1} parent=1 // pred_check_branch
      %248 = sbr.rel (0) target = $region41
    $region40: #{tpu_custom_call.1} parent=1 // pred_region
      %s250 = ssub.s32 128, 128
      %251 = vsyncadd [#allocation4], %s250
      %s253 = sshll.u32 [#allocation10], 4
      %s254 = int_to_ptr.vmem [resolvable:$true] %s253
      %256 = dma.vmem_to_hbm [thread:$0]  %s254, 128, %s5, [#allocation4]
    $region41: #{tpu_custom_call.1} parent=1 // pred_fallthru
      _
    // Predicated region
    $region42: #{tpu_custom_call.1} parent=1 // pred_check
      _
    $region43: #{tpu_custom_call.1} parent=1 // pred_check_branch
      %258 = sbr.rel (0) target = $region45
    $region44: #{tpu_custom_call.1} parent=1 // pred_region
      %259 = dma.done [#allocation4], 128
    $region45: #{tpu_custom_call.1} parent=1 // pred_fallthru
      _
    %260 = vsyncpa [#allocation3], 1
    %261 = vsyncpa [#allocation6], 1
    %262 = vsyncpa [#allocation9], 1
    %263 = vsyncpa [#allocation4], 1

</llo_original>
